<compile_context>
chip_gen: v6e
topology: v6e:2x2x1
jax: 0.10.0
libtpu: 0.0.40
codegen_flags: <defaults>
</compile_context>

<pallas_src>
import jax
import jax.numpy as jnp
from jax import lax
from jax.experimental import pallas as pl
from jax.experimental.pallas import tpu as pltpu


def _decoder_kernel(len_ref, x_ref, w_ref, o_ref):
    # len_ref: (N,)     int32, SMEM (scalar-prefetched sequence lengths)
    # x_ref:   (tt, H)  encoder-output row tile of batch element b
    # w_ref:   (tn, H)  vocab tile of the (V, H) projection weight (native layout)
    # o_ref:   (tt, tn) masked logits tile
    b = pl.program_id(1)
    ti = pl.program_id(2)
    tt = x_ref.shape[0]

    # (tt, H) x (tn, H) contracting the H axis of both -> (tt, tn) on the MXU.
    logits = lax.dot_general(
        x_ref[...], w_ref[...],
        dimension_numbers=(((1,), (1,)), ((), ())),
        preferred_element_type=jnp.float32,
    )

    # sequence_mask for this row tile, built in-kernel (no HBM mask input).
    t_ids = ti * tt + lax.broadcasted_iota(jnp.int32, (tt, 1), 0)
    mask = (t_ids < len_ref[b]).astype(jnp.float32)

    o_ref[...] = (logits * mask).astype(o_ref.dtype)


def _pick_tile(full, preferred, quantum):
    """Largest multiple of `quantum` <= `preferred` that divides `full`;
    falls back to the full dim (always a legal BlockSpec block)."""
    t = (min(preferred, full) // quantum) * quantum
    while t >= quantum:
        if full % t == 0:
            return t
        t -= quantum
    return full


def decoder_forward(encoder_padded_outputs, encoder_input_lengths, weight,
                    *, tt_pref=256, tn_pref=512, out_dtype=None):
    """
    Args:
      encoder_padded_outputs: (N, Ti, H) float32
      encoder_input_lengths:  (N,)       int
      weight:                 (V, H)     float32  (nn.Linear weight layout)
    Returns:
      logits: (N, Ti, V) masked logits
    """
    N, Ti, H = encoder_padded_outputs.shape
    V, Hw = weight.shape
    assert Hw == H, "weight must be (n_tgt_vocab, d_input)"
    out_dtype = out_dtype or encoder_padded_outputs.dtype

    tt = _pick_tile(Ti, tt_pref, 8)     # row tile (sublane quantum for f32)
    tn = _pick_tile(V, tn_pref, 128)    # vocab tile (lane quantum)

    # Vocab outermost: the weight tile changes only V//tn times; the cheaper
    # x row tile is the one re-fetched per vocab tile.
    grid = (V // tn, N, Ti // tt)

    lengths = encoder_input_lengths.astype(jnp.int32)

    cost = pl.CostEstimate(
        flops=2 * N * Ti * H * V,
        transcendentals=0,
        bytes_accessed=4 * (N * Ti * H + H * V + N * Ti * V),
    )

    # Double-buffered f32 tiles (x, w, out) + headroom; stays within v7x VMEM.
    vmem_need = 2 * 4 * (tt * H + tn * H + tt * tn)
    vmem_limit = int(min(max(vmem_need + (8 << 20), 32 << 20), 48 << 20))

    return pl.pallas_call(
        _decoder_kernel,
        out_shape=jax.ShapeDtypeStruct((N, Ti, V), out_dtype),
        grid_spec=pltpu.PrefetchScalarGridSpec(
            num_scalar_prefetch=1,
            grid=grid,
            in_specs=[
                # x: one (tt, H) row tile of batch element b (leading dim squeezed).
                pl.BlockSpec((None, tt, H), lambda vj, b, ti, lens: (b, ti, 0)),
                # weight: one (tn, H) vocab tile, native (V, H) layout.
                pl.BlockSpec((tn, H), lambda vj, b, ti, lens: (vj, 0)),
            ],
            out_specs=pl.BlockSpec((None, tt, tn),
                                   lambda vj, b, ti, lens: (b, ti, vj)),
        ),
        compiler_params=pltpu.CompilerParams(
            dimension_semantics=("parallel", "parallel", "parallel"),
            vmem_limit_bytes=vmem_limit,
        ),
        cost_estimate=cost,
    )(lengths, encoder_padded_outputs, weight)


def _reference(encoder_padded_outputs, encoder_input_lengths, weight):
    N, Ti, H = encoder_padded_outputs.shape
    logits = jnp.einsum("nth,vh->ntv", encoder_padded_outputs, weight)
    t_idx = jnp.arange(Ti, dtype=jnp.int32)[None, :]
    mask = (t_idx < encoder_input_lengths[:, None]).astype(jnp.float32)
    return logits * mask[:, :, None]


if __name__ == "__main__":
    # Small shapes consistent with the module's forward:
    #   N=2 batch, Ti=8 encoder frames, H=32 hidden, V=256 target vocab.
    N, Ti, H, V = 2, 8, 32, 256

    key = jax.random.PRNGKey(0)
    k_x, k_w = jax.random.split(key)

    encoder_padded_outputs = jax.random.normal(k_x, (N, Ti, H), dtype=jnp.float32)
    encoder_input_lengths = jnp.array([8, 5], dtype=jnp.int32)

    # xavier_normal_ init for tgt_word_prj.weight (shape (V, H)).
    xavier_std = (2.0 / (H + V)) ** 0.5
    weight = xavier_std * jax.random.normal(k_w, (V, H), dtype=jnp.float32)

    logits = decoder_forward(encoder_padded_outputs, encoder_input_lengths, weight)
    logits = jax.block_until_ready(logits)

    ref = _reference(encoder_padded_outputs, encoder_input_lengths, weight)
    assert logits.shape == (N, Ti, V)
    assert jnp.allclose(logits, ref, atol=1e-5, rtol=1e-5), "mismatch vs reference"

    print("KERNEL_OK")
</pallas_src>

<mosaic_0001>
module attributes {stable_mosaic.version = 11 : i64} {
  func.func @_decoder_kernel(%arg0: i32, %arg1: i32, %arg2: i32, %arg3: memref<2xi32, #tpu.memory_space<smem>>, %arg4: memref<1x8x32xf32, #tpu.memory_space<vmem>>, %arg5: memref<256x32xf32, #tpu.memory_space<vmem>>, %arg6: memref<1x8x256xf32, #tpu.memory_space<vmem>>) attributes {dimension_semantics = [#tpu.dimension_semantics<parallel>, #tpu.dimension_semantics<parallel>, #tpu.dimension_semantics<parallel>], iteration_bounds = array<i64: 1, 2, 1>, scalar_prefetch = 1 : i64, scratch_operands = 0 : i64, tpu.core_type = #tpu.core_type<tc>, window_params = [{transform_indices = @transform_0, window_bounds = array<i64: 1, 8, 32>}, {transform_indices = @transform_1, window_bounds = array<i64: 256, 32>}, {transform_indices = @transform_2, window_bounds = array<i64: 1, 8, 256>}]} {
    %c0 = arith.constant 0 : index
    %c0_0 = arith.constant 0 : index
    %c0_1 = arith.constant 0 : index
    %0 = vector.load %arg4[%c0, %c0_0, %c0_1] : memref<1x8x32xf32, #tpu.memory_space<vmem>>, vector<1x8x32xf32>
    %1 = vector.shape_cast %0 : vector<1x8x32xf32> to vector<8x32xf32>
    %c0_2 = arith.constant 0 : index
    %c0_3 = arith.constant 0 : index
    %2 = vector.load %arg5[%c0_2, %c0_3] : memref<256x32xf32, #tpu.memory_space<vmem>>, vector<256x32xf32>
    %cst = arith.constant dense<0.000000e+00> : vector<8x256xf32>
    %3 = tpu.matmul %1, %2, %cst {dimension_numbers = #tpu.dot_dimension_numbers<[1], [1], [0], [0], [0, 0, 1, 0], [], []>} : vector<8x32xf32>, vector<256x32xf32>, vector<8x256xf32> -> vector<8x256xf32>
    %c8_i32 = arith.constant 8 : i32
    %4 = arith.muli %arg2, %c8_i32 : i32
    %5 = tpu.iota {dimensions = array<i32: 0>} : vector<8x1xi32>
    %6 = vector.broadcast %4 : i32 to vector<8x1xi32>
    %7 = arith.addi %6, %5 : vector<8x1xi32>
    %8 = arith.index_cast %arg1 : i32 to index
    %9 = memref.load %arg3[%8] : memref<2xi32, #tpu.memory_space<smem>>
    %10 = vector.broadcast %9 : i32 to vector<8x1xi32>
    %11 = arith.cmpi slt, %7, %10 : vector<8x1xi32>
    %12 = arith.extui %11 : vector<8x1xi1> to vector<8x1xi32>
    %13 = arith.sitofp %12 : vector<8x1xi32> to vector<8x1xf32>
    %14 = vector.broadcast %13 : vector<8x1xf32> to vector<8x256xf32>
    %15 = arith.mulf %3, %14 : vector<8x256xf32>
    %c0_4 = arith.constant 0 : index
    %c0_5 = arith.constant 0 : index
    %c0_6 = arith.constant 0 : index
    %16 = vector.load %arg6[%c0_4, %c0_5, %c0_6] : memref<1x8x256xf32, #tpu.memory_space<vmem>>, vector<1x8x256xf32>
    %17 = vector.shape_cast %16 : vector<1x8x256xf32> to vector<8x256xf32>
    %18 = vector.shape_cast %15 : vector<8x256xf32> to vector<1x8x256xf32>
    tpu.vector_store %arg6[%c0_4, %c0_5, %c0_6], %18 {strides = array<i32>} : memref<1x8x256xf32, #tpu.memory_space<vmem>>, vector<1x8x256xf32>,
    return
  }
  func.func @transform_0(%arg0: i32, %arg1: i32, %arg2: i32, %arg3: memref<2xi32, #tpu.memory_space<smem>>) -> (i32, i32, i32) {
    %c0_i32 = arith.constant 0 : i32
    %c0_i32_0 = arith.constant 0 : i32
    return %arg1, %arg2, %c0_i32 : i32, i32, i32
  }
  func.func @transform_1(%arg0: i32, %arg1: i32, %arg2: i32, %arg3: memref<2xi32, #tpu.memory_space<smem>>) -> (i32, i32) {
    %c0_i32 = arith.constant 0 : i32
    %c0_i32_0 = arith.constant 0 : i32
    return %arg0, %c0_i32 : i32, i32
  }
  func.func @transform_2(%arg0: i32, %arg1: i32, %arg2: i32, %arg3: memref<2xi32, #tpu.memory_space<smem>>) -> (i32, i32, i32) {
    %c0_i32 = arith.constant 0 : i32
    return %arg1, %arg2, %arg0 : i32, i32, i32
  }
}

</mosaic_0001>

<llo_original>
// kernel: tpu_custom_call.1
$region0: #{tpu_custom_call.1}
  #allocation0 [shape = 'u32[]', space=smem, size = 0x4, offset = 0x4, fixed_abs, tag = 'smem constant byte address 0x4 - core index']
  #allocation1 [shape = 'u32[144,128]{1,0:T(1,128)}', space=vmem, size = 0x12000, scoped, tag = 'internal scratch']
  #allocation2 [shape = 's32[1]{0}', space=sflag, size = 0x4, scoped, tag = 'scoped memory for tpu_custom_call.1']
  #allocation3 [shape = 'u8[512]{0}', space=smem, size = 0x200, scoped, tag = 'prefetched SMEM operand 0']
  %s0 = inlined_call_operand.vmem [shape: s32[2], index: 0, kind: input, shape index: {}]
  %s1 = inlined_call_operand.vmem [shape: f32[2,8,32], index: 1, kind: input, shape index: {}]
  %s2 = inlined_call_operand.vmem [shape: f32[256,32], index: 2, kind: input, shape index: {}]
  %s3 = inlined_call_operand.hbm [shape: f32[2,8,256], index: 3, kind: output, shape index: {}]
  %s4 = sld [smem:[#allocation0]]
  $region41: #{tpu_custom_call.1} parent=0
    _
  %s6 = ssub.s32 1, %s4
  %s7 = scalar_select 0, %s6, %s4
  %s8 = sshll.u32 %s0, 4
  %s9 = int_to_ptr.vmem [resolvable:$true] %s8
  %11 = dma.vmem_to_smem %s9, 16, [#allocation3], [#allocation2]
  %12 = dma.done [#allocation2], 16
  %13 = sfence
  $region1: #{tpu_custom_call.1} parent=0
    #allocation4 [shape = 'u8[16384]{0}', space=vmem, size = 0x4000, scoped, tag = 'output window, operand 0']
    #allocation5 [shape = 's32[2]{0}', space=sflag, size = 0x8, scoped, tag = 'scoped memory for tpu_custom_call.1']
    %14 = vsyncpa [#allocation5], 0
    %s15 = scalar_lea.sflag [#allocation5], 1
    %16 = vsyncpa %s15, 0
    loop: start=0, step=1, limit=4
    $region2: #{tpu_custom_call.1} parent=1 // loop_pre_header
      _
    $region3: #{tpu_custom_call.1} parent=1 // loop_header
      %s18 = sphi 0, %s22
      %p19 = scmp.ge.s32.totalorder %s18, 4
      %s25 = sphi 0, %s44
      %s26 = sphi 0, %s40
      %s27 = sphi 0, %s36
      %s28 = sphi 0, %s25
      %s29 = sphi 0, %s26
      %s30 = sphi 0, %s27
      %s31 = sphi 0, %s28
      %s32 = sphi 0, %s29
      %s33 = sphi 0, %s30
      %s49 = sphi 0, %s51
      %s52 = sphi 0, %s49
      %s53 = sphi 0, %s52
      %s69 = sphi 0, %s53
      %s75 = sphi 0, %s77
      %s78 = sphi 0, %s75
      %s79 = sphi 0, %s78
      %s95 = sphi 0, %s79
      %s105 = sphi 0, %s107
      %s108 = sphi 0, %s105
      %s109 = sphi 0, %s108
      %s125 = sphi 0, %s109
    $region4: #{tpu_custom_call.1} parent=1 // loop_header_branch
      %21 = sbr.rel (%p19) target = $region8
    $region5: #{tpu_custom_call.1} parent=1 // loop_body
      %s23 = ssub.s32 %s18, 1
      %s24 = ssub.s32 %s18, 2
      %s34 = sadd.s32 1, %s27
      %p35 = scmp.ge.s32.totalorder %s34, 1
      %s36 = scalar_select %p35, 0, %s34
      %s37 = sadd.s32 1, %s26
      %s38 = scalar_select %p35, %s37, %s26
      %p39 = scmp.ge.s32.totalorder %s38, 2
      %s40 = scalar_select %p39, 0, %s38
      %s41 = sadd.s32 1, %s25
      %s42 = scalar_select %p39, %s41, %s25
      %p43 = scmp.ge.s32.totalorder %s42, 1
      %s44 = scalar_select %p43, 0, %s42
      %s45 = ssub.s32 %s26, %s40
      %s46 = ssub.s32 %s27, %s36
      %s47 = sor.u32 %s45, %s46
      %p48 = scmp.eq.s32.totalorder %s47, 0
      %s50 = sadd.s32 %s49, 1
      %s51 = scalar_select %p48, %s49, %s50
      %p54 = pneg %p48
      %p55 = scmp.eq.s32.totalorder %s18, 1
      %p56 = por %p54, %p55
      %p57 = scmp.ne.s32.totalorder %s49, %s52
      %p58 = scmp.eq.s32.totalorder %s18, 0
      %p59 = por %p57, %p58
      %p60 = scmp.ne.s32.totalorder %s49, %s52
      %p61 = scmp.eq.s32.totalorder %s23, 1
      %p62 = por %p60, %p61
      %p63 = scmp.ne.s32.totalorder %s52, %s53
      %p64 = scmp.eq.s32.totalorder %s23, 0
      %p65 = por %p63, %p64
      %p66 = scmp.ne.s32.totalorder %s52, %s53
      %p67 = scmp.eq.s32.totalorder %s24, 1
      %p68 = por %p66, %p67
      %p70 = scmp.ne.s32.totalorder %s53, %s69
      %p71 = scmp.eq.s32.totalorder %s24, 0
      %p72 = por %p70, %p71
      %s73 = ssub.s32 %s25, %s44
      %p74 = scmp.eq.s32.totalorder %s73, 0
      %s76 = sadd.s32 %s75, 1
      %s77 = scalar_select %p74, %s75, %s76
      %p80 = pneg %p74
      %p81 = scmp.eq.s32.totalorder %s18, 1
      %p82 = por %p80, %p81
      %p83 = scmp.ne.s32.totalorder %s75, %s78
      %p84 = scmp.eq.s32.totalorder %s18, 0
      %p85 = por %p83, %p84
      %p86 = scmp.ne.s32.totalorder %s75, %s78
      %p87 = scmp.eq.s32.totalorder %s23, 1
      %p88 = por %p86, %p87
      %p89 = scmp.ne.s32.totalorder %s78, %s79
      %p90 = scmp.eq.s32.totalorder %s23, 0
      %p91 = por %p89, %p90
      %p92 = scmp.ne.s32.totalorder %s78, %s79
      %p93 = scmp.eq.s32.totalorder %s24, 1
      %p94 = por %p92, %p93
      %p96 = scmp.ne.s32.totalorder %s79, %s95
      %p97 = scmp.eq.s32.totalorder %s24, 0
      %p98 = por %p96, %p97
      %s99 = ssub.s32 %s26, %s40
      %s100 = ssub.s32 %s27, %s36
      %s101 = sor.u32 %s99, %s100
      %s102 = ssub.s32 %s25, %s44
      %s103 = sor.u32 %s101, %s102
      %p104 = scmp.eq.s32.totalorder %s103, 0
      %s106 = sadd.s32 %s105, 1
      %s107 = scalar_select %p104, %s105, %s106
      %p110 = pneg %p104
      %p111 = scmp.eq.s32.totalorder %s18, 1
      %p112 = por %p110, %p111
      %p113 = scmp.ne.s32.totalorder %s105, %s108
      %p114 = scmp.eq.s32.totalorder %s18, 0
      %p115 = por %p113, %p114
      %p116 = scmp.ne.s32.totalorder %s105, %s108
      %p117 = scmp.eq.s32.totalorder %s23, 1
      %p118 = por %p116, %p117
      %p119 = scmp.ne.s32.totalorder %s108, %s109
      %p120 = scmp.eq.s32.totalorder %s23, 0
      %p121 = por %p119, %p120
      %p122 = scmp.ne.s32.totalorder %s108, %s109
      %p123 = scmp.eq.s32.totalorder %s24, 1
      %p124 = por %p122, %p123
      %p126 = scmp.ne.s32.totalorder %s109, %s125
      %p127 = scmp.eq.s32.totalorder %s24, 0
      %p128 = por %p126, %p127
      %p129 = scmp.le.s32.totalorder 1, %s18
      %p130 = scmp.lt.s32.totalorder %s18, 3
      %p131 = pnand %p129, %p130
      %p132 = pneg %p131
      // Predicated region
      $region9: #{tpu_custom_call.1} parent=5 // pred_check
        _
      $region10: #{tpu_custom_call.1} parent=5 // pred_check_branch
        %134 = sbr.rel (%p131) target = $region12
      $region11: #{tpu_custom_call.1} parent=5 // pred_region
        %s135 = ssub.s32 %s18, 1
        // Predicated region
        $region13: #{tpu_custom_call.1} parent=11 // pred_check
          %p136 = pneg %p91
        $region14: #{tpu_custom_call.1} parent=11 // pred_check_branch
          %138 = sbr.rel (%p136) target = $region16
        $region15: #{tpu_custom_call.1} parent=11 // pred_region
          %s139 = smul.u32 32, %s28
          %p140 = scmp.lt.s32.totalorder %s139, 31
          %s141 = scalar_select %p140, %s139, 31
          %s142 = smul.addr %s141, 8
          %s143 = scalar_lea.vmem %s2, %s142
          %s144 = smul.u32 32, %s28
        $region16: #{tpu_custom_call.1} parent=11 // pred_fallthru
          _
      $region12: #{tpu_custom_call.1} parent=5 // pred_fallthru
        _
      %p145 = scmp.lt.s32.totalorder %s18, 2
      // Predicated region
      $region17: #{tpu_custom_call.1} parent=5 // pred_check
        %p146 = pneg %p145
      $region18: #{tpu_custom_call.1} parent=5 // pred_check_branch
        %148 = sbr.rel (%p146) target = $region20
      $region19: #{tpu_custom_call.1} parent=5 // pred_region
        // Predicated region
        $region21: #{tpu_custom_call.1} parent=19 // pred_check
          %p149 = pneg %p59
        $region22: #{tpu_custom_call.1} parent=19 // pred_check_branch
          %151 = sbr.rel (%p149) target = $region24
        $region23: #{tpu_custom_call.1} parent=19 // pred_region
          %p152 = scmp.lt.s32.totalorder %s26, 1
          %s153 = scalar_select %p152, %s26, 1
          %p154 = scmp.lt.s32.totalorder %s27, 0
          %s155 = scalar_select %p154, %s27, 0
          %s156 = sadd.s32 %s155, %s153
          %s157 = smul.addr %s156, 8
          %s158 = scalar_lea.vmem %s1, %s157
        $region24: #{tpu_custom_call.1} parent=19 // pred_fallthru
          _
      $region20: #{tpu_custom_call.1} parent=5 // pred_fallthru
        _
      %p159 = scmp.le.s32.totalorder 1, %s18
      %p160 = scmp.lt.s32.totalorder %s18, 3
      %p161 = pnand %p159, %p160
      %p162 = pneg %p161
      // Predicated region
      $region25: #{tpu_custom_call.1} parent=5 // pred_check
        _
      $region26: #{tpu_custom_call.1} parent=5 // pred_check_branch
        %164 = sbr.rel (%p161) target = $region28
      $region27: #{tpu_custom_call.1} parent=5 // pred_region
        %s165 = ssub.s32 %s18, 1
        %p166 = scmp.lt.s32.totalorder %s29, 1
        %s167 = scalar_select %p166, %s29, 1
        %p168 = scmp.lt.s32.totalorder %s30, 0
        %s169 = scalar_select %p168, %s30, 0
        %s170 = sadd.s32 %s169, %s167
        %s171 = smul.addr %s170, 8
        %s172 = scalar_lea.vmem %s1, %s171
        %p173 = pneg %p65
        %p174 = pneg %p62
        %s175 = smul.u32 32, %s28
        %p176 = scmp.lt.s32.totalorder %s175, 31
        %s177 = scalar_select %p176, %s175, 31
        %s178 = smul.addr %s177, 8
        %s179 = scalar_lea.vmem %s2, %s178
        %p180 = pneg %p91
        %p181 = pneg %p88
        %p182 = pneg %p121
        %p183 = pneg %p118
        %s184 = sand.u32 %s108, 1
        %s185 = scalar_lea.sflag [#allocation5], %s184
        %s186 = sand.u32 %s108, 1
        %s187 = smul.addr %s186, 16
        %s188 = scalar_lea.vmem [#allocation4], %s187
        %p189 = scmp.lt.s32.totalorder %s29, 1
        %s190 = scalar_select %p189, %s29, 1
        %p191 = scmp.lt.s32.totalorder %s30, 0
        %s192 = scalar_select %p191, %s30, 0
        %s193 = sadd.s32 %s192, %s190
        %s194 = smul.addr %s193, 8
        %s195 = scalar_lea.vmem %s1, %s194
        %s196 = smul.u32 32, %s28
        %p197 = scmp.lt.s32.totalorder %s196, 31
        %s198 = scalar_select %p197, %s196, 31
        %s199 = smul.addr %s198, 8
        %s200 = scalar_lea.vmem %s2, %s199
        %s201 = smul.u32 32, %s28
        %s202 = smul.u32 2, %s28
        %v203 = vld [vmem:[%s195] sm:$0xff]
        %v204 = vld [vmem:[%s200] sm:$0xff]
        %v205 = vld [vmem:[%s200 + $0x8] sm:$0xff]
        %v206 = vld [vmem:[%s200 + $0x10] sm:$0xff]
        %v207 = vld [vmem:[%s200 + $0x18] sm:$0xff]
        %v208 = vld [vmem:[%s200 + $0x20] sm:$0xff]
        %v209 = vld [vmem:[%s200 + $0x28] sm:$0xff]
        %v210 = vld [vmem:[%s200 + $0x30] sm:$0xff]
        %v211 = vld [vmem:[%s200 + $0x38] sm:$0xff]
        %v212 = vld [vmem:[%s200 + $0x40] sm:$0xff]
        %v213 = vld [vmem:[%s200 + $0x48] sm:$0xff]
        %v214 = vld [vmem:[%s200 + $0x50] sm:$0xff]
        %v215 = vld [vmem:[%s200 + $0x58] sm:$0xff]
        %v216 = vld [vmem:[%s200 + $0x60] sm:$0xff]
        %v217 = vld [vmem:[%s200 + $0x68] sm:$0xff]
        %v218 = vld [vmem:[%s200 + $0x70] sm:$0xff]
        %v219 = vld [vmem:[%s200 + $0x78] sm:$0xff]
        %v220 = vld [vmem:[%s200 + $0x80] sm:$0xff]
        %v221 = vld [vmem:[%s200 + $0x88] sm:$0xff]
        %v222 = vld [vmem:[%s200 + $0x90] sm:$0xff]
        %v223 = vld [vmem:[%s200 + $0x98] sm:$0xff]
        %v224 = vld [vmem:[%s200 + $0xa0] sm:$0xff]
        %v225 = vld [vmem:[%s200 + $0xa8] sm:$0xff]
        %v226 = vld [vmem:[%s200 + $0xb0] sm:$0xff]
        %v227 = vld [vmem:[%s200 + $0xb8] sm:$0xff]
        %v228 = vld [vmem:[%s200 + $0xc0] sm:$0xff]
        %v229 = vld [vmem:[%s200 + $0xc8] sm:$0xff]
        %v230 = vld [vmem:[%s200 + $0xd0] sm:$0xff]
        %v231 = vld [vmem:[%s200 + $0xd8] sm:$0xff]
        %v232 = vld [vmem:[%s200 + $0xe0] sm:$0xff]
        %v233 = vld [vmem:[%s200 + $0xe8] sm:$0xff]
        %v234 = vld [vmem:[%s200 + $0xf0] sm:$0xff]
        %v235 = vld [vmem:[%s200 + $0xf8] sm:$0xff]
        %vm236 = vcmask 261120
        %v238 = vsel %vm236, %v203, 0
        %v241 = vsel %vm236, %v204, 0
        %v244 = vsel %vm236, %v205, 0
        %v247 = vsel %vm236, %v206, 0
        %v250 = vsel %vm236, %v207, 0
        %v253 = vsel %vm236, %v208, 0
        %v256 = vsel %vm236, %v209, 0
        %v259 = vsel %vm236, %v210, 0
        %v262 = vsel %vm236, %v211, 0
        %v265 = vsel %vm236, %v212, 0
        %v268 = vsel %vm236, %v213, 0
        %v271 = vsel %vm236, %v214, 0
        %v274 = vsel %vm236, %v215, 0
        %v277 = vsel %vm236, %v216, 0
        %v280 = vsel %vm236, %v217, 0
        %v283 = vsel %vm236, %v218, 0
        %v286 = vsel %vm236, %v219, 0
        %v289 = vsel %vm236, %v220, 0
        %v292 = vsel %vm236, %v221, 0
        %v295 = vsel %vm236, %v222, 0
        %v298 = vsel %vm236, %v223, 0
        %v301 = vsel %vm236, %v224, 0
        %v304 = vsel %vm236, %v225, 0
        %v307 = vsel %vm236, %v226, 0
        %v310 = vsel %vm236, %v227, 0
        %v313 = vsel %vm236, %v228, 0
        %v316 = vsel %vm236, %v229, 0
        %v319 = vsel %vm236, %v230, 0
        %v322 = vsel %vm236, %v231, 0
        %v325 = vsel %vm236, %v232, 0
        %v328 = vsel %vm236, %v233, 0
        %v331 = vsel %vm236, %v234, 0
        %v334 = vsel %vm236, %v235, 0
        %336 = vmatprep.subr.mxu0 0.0
        %337 = vmatpush1.xpose.msra.mxu0 %v286
        %338 = vmatprep.subr.mxu0 0.0
        %339 = vmatpush1.xpose.msra.mxu0 %v283
        %340 = vmatprep.subr.mxu0 0.0
        %341 = vmatpush1.xpose.msra.mxu0 %v280
        %342 = vmatprep.subr.mxu0 0.0
        %343 = vmatpush1.xpose.msra.mxu0 %v277
        %344 = vmatprep.subr.mxu0 0.0
        %345 = vmatpush1.xpose.msra.mxu0 %v274
        %346 = vmatprep.subr.mxu0 0.0
        %347 = vmatpush1.xpose.msra.mxu0 %v271
        %348 = vmatprep.subr.mxu0 0.0
        %349 = vmatpush1.xpose.msra.mxu0 %v268
        %350 = vmatprep.subr.mxu0 0.0
        %351 = vmatpush1.xpose.msra.mxu0 %v265
        %352 = vmatprep.subr.mxu0 0.0
        %353 = vmatpush1.xpose.msra.mxu0 %v262
        %354 = vmatprep.subr.mxu0 0.0
        %355 = vmatpush1.xpose.msra.mxu0 %v259
        %356 = vmatprep.subr.mxu0 0.0
        %357 = vmatpush1.xpose.msra.mxu0 %v256
        %358 = vmatprep.subr.mxu0 0.0
        %359 = vmatpush1.xpose.msra.mxu0 %v253
        %360 = vmatprep.subr.mxu0 0.0
        %361 = vmatpush1.xpose.msra.mxu0 %v250
        %362 = vmatprep.subr.mxu0 0.0
        %363 = vmatpush1.xpose.msra.mxu0 %v247
        %364 = vmatprep.subr.mxu0 0.0
        %365 = vmatpush1.xpose.msra.mxu0 %v244
        %366 = vmatprep.subr.mxu0 0.0
        %367 = vmatpush1.xpose.msra.mxu0 %v241
        %368 = vmatprep.subr.mxu0 0.0
        %369 = vmatpush2.xpose.msra.mxu0 %v334
        %370 = vmatprep.subr.mxu0 0.0
        %371 = vmatpush2.xpose.msra.mxu0 %v331
        %372 = vmatprep.subr.mxu0 0.0
        %373 = vmatpush2.xpose.msra.mxu0 %v328
        %374 = vmatprep.subr.mxu0 0.0
        %375 = vmatpush2.xpose.msra.mxu0 %v325
        %376 = vmatprep.subr.mxu0 0.0
        %377 = vmatpush2.xpose.msra.mxu0 %v322
        %378 = vmatprep.subr.mxu0 0.0
        %379 = vmatpush2.xpose.msra.mxu0 %v319
        %380 = vmatprep.subr.mxu0 0.0
        %381 = vmatpush2.xpose.msra.mxu0 %v316
        %382 = vmatprep.subr.mxu0 0.0
        %383 = vmatpush2.xpose.msra.mxu0 %v313
        %384 = vmatprep.subr.mxu0 0.0
        %385 = vmatpush2.xpose.msra.mxu0 %v310
        %386 = vmatprep.subr.mxu0 0.0
        %387 = vmatpush2.xpose.msra.mxu0 %v307
        %388 = vmatprep.subr.mxu0 0.0
        %389 = vmatpush2.xpose.msra.mxu0 %v304
        %390 = vmatprep.subr.mxu0 0.0
        %391 = vmatpush2.xpose.msra.mxu0 %v301
        %392 = vmatprep.subr.mxu0 0.0
        %393 = vmatpush2.xpose.msra.mxu0 %v298
        %394 = vmatprep.subr.mxu0 0.0
        %395 = vmatpush2.xpose.msra.mxu0 %v295
        %396 = vmatprep.subr.mxu0 0.0
        %397 = vmatpush2.xpose.msra.mxu0 %v292
        %398 = vmatprep.subr.mxu0 0.0
        %399 = vmatpush2.xpose.msra.mxu0 %v289
        %400 = vmatprep.mubr.f32.mxu0 0.0
        %401 = vmatmul.mubr.f32.gmra.mxu0 %v238
        %v402 = vpop.f32.mrf.mxu0
        %v403 = vadd.f32 0.0, %v402
        %v404 = vpop.f32.mrf.mxu0
        %v405 = vadd.f32 0.0, %v404
        %406 = vdwg.mxu0
        %s407 = smul.u32 %s30, 8
        %v408 = vlaneseq
        %v409 = vshrl.u32 %v408, 7
        %v410 = vstv %s407
        %v411 = vadd.s32 %v410, %v409
        %s412 = sld [smem:[#allocation3 + %s29]]
        %v413 = vstv %s412
        %vm414 = vcmp.lt.s32.totalorder %v411, %v413
        %v415 = vsel %vm414, 1, 0
        %v416 = vcvt.s32.f32 %v415
        %v417 = vmul.f32 %v403, %v416
        %v418 = vmul.f32 %v405, %v416
        %419 = vst [vmem:[%s188] sm:$0xff] %v417
        %420 = vst [vmem:[%s188 + $0x8] sm:$0xff] %v418
        %s421 = sand.u32 %s108, 1
        %s422 = scalar_lea.sflag [#allocation5], %s421
        %s423 = sand.u32 %s108, 1
        %s424 = smul.addr %s423, 16
        %s425 = scalar_lea.vmem [#allocation4], %s424
        // Predicated region
        $region29: #{tpu_custom_call.1} parent=27 // pred_check
          %p426 = pneg %p118
        $region30: #{tpu_custom_call.1} parent=27 // pred_check_branch
          %428 = sbr.rel (%p426) target = $region32
        $region31: #{tpu_custom_call.1} parent=27 // pred_region
          %s429 = smul.u32 2, %s28
          %s431 = ssub.s32 256, 256
          %432 = vsyncadd %s422, %s431
          %s433 = smul.addr %s30, 2
          %s434 = sadd.s32 %s429, %s433
          %s435 = smul.addr %s29, 2
          %s436 = sadd.s32 %s434, %s435
          %s437 = smul.addr %s436, 128
          %s438 = scalar_lea.hbm %s3, %s437
          %s440 = sshll.u32 %s425, 4
          %s441 = int_to_ptr.vmem [resolvable:$true] %s440
          %443 = dma.vmem_to_hbm [thread:$0]  %s441, 256, %s438, %s422
        $region32: #{tpu_custom_call.1} parent=27 // pred_fallthru
          _
      $region28: #{tpu_custom_call.1} parent=5 // pred_fallthru
        _
      %p444 = scmp.le.s32.totalorder 2, %s18
      // Predicated region
      $region33: #{tpu_custom_call.1} parent=5 // pred_check
        %p445 = pneg %p444
      $region34: #{tpu_custom_call.1} parent=5 // pred_check_branch
        %447 = sbr.rel (%p445) target = $region36
      $region35: #{tpu_custom_call.1} parent=5 // pred_region
        %s448 = ssub.s32 %s18, 2
        // Predicated region
        $region37: #{tpu_custom_call.1} parent=35 // pred_check
          %p449 = pneg %p124
        $region38: #{tpu_custom_call.1} parent=35 // pred_check_branch
          %451 = sbr.rel (%p449) target = $region40
        $region39: #{tpu_custom_call.1} parent=35 // pred_region
          %s452 = sand.u32 %s109, 1
          %s453 = scalar_lea.sflag [#allocation5], %s452
          %s454 = sand.u32 %s109, 1
          %s455 = smul.addr %s454, 16
          %s456 = scalar_lea.vmem [#allocation4], %s455
          %457 = dma.done %s453, 256
        $region40: #{tpu_custom_call.1} parent=35 // pred_fallthru
          _
      $region36: #{tpu_custom_call.1} parent=5 // pred_fallthru
        _
    $region6: #{tpu_custom_call.1} parent=1 // loop_footer
      %s22 = sadd.s32 1, %s18
    $region7: #{tpu_custom_call.1} parent=1 // loop_footer_branch
      %17 = sbr.rel target = $region3
    $region8: #{tpu_custom_call.1} parent=1 // loop_exit
      _
    %458 = vsyncpa [#allocation5], 1
    %s459 = scalar_lea.sflag [#allocation5], 1
    %460 = vsyncpa %s459, 1

</llo_original>
